<compile_context>
chip_gen: v6e
topology: v6e:2x2x1
jax: 0.10.0
libtpu: 0.0.40
codegen_flags: <defaults>
</compile_context>

<pallas_src>
from functools import partial

import jax
import jax.numpy as jnp
from jax import lax
from jax.experimental import pallas as pl
from jax.experimental.pallas import tpu as pltpu


# ----------------------------------------------------------------------------
# Fused kernel: LayerNorm -> Linear(D, D) -> dropout -> residual add
# ----------------------------------------------------------------------------
def _fused_sublayer_kernel(seed_ref, x_ref, g_ref, b_ref, w_ref, bias_ref, o_ref,
                           *, n_features, eps, p, training, tm):
    x = x_ref[...].astype(jnp.float32)                         # (TM, D)

    # ---- LayerNorm (torch-style: unbiased std, denom = std + eps) ----
    mean = jnp.mean(x, axis=-1, keepdims=True)                 # (TM, 1)
    centered = x - mean
    var = jnp.sum(centered * centered, axis=-1, keepdims=True) * (
        1.0 / float(n_features - 1))
    inv = 1.0 / (jnp.sqrt(var) + eps)                          # (TM, 1)
    normed = (g_ref[...].astype(jnp.float32) * (centered * inv)
              + b_ref[...].astype(jnp.float32))                # (TM, D)

    # ---- sublayer: Linear(D, D) on the MXU, f32 accumulation ----
    y = jnp.dot(normed.astype(w_ref.dtype), w_ref[...],
                preferred_element_type=jnp.float32)            # (TM, D)
    y = y + bias_ref[...].astype(jnp.float32)

    # ---- inverted dropout (stateless counter-based PRNG) ----
    if training and p > 0.0:
        seed = seed_ref[0].astype(jnp.uint32)
        row0 = (pl.program_id(0) * tm).astype(jnp.uint32)
        rows = lax.broadcasted_iota(jnp.int32, y.shape, 0).astype(jnp.uint32) + row0
        cols = lax.broadcasted_iota(jnp.int32, y.shape, 1).astype(jnp.uint32)
        # unique per-element counter mixed with the seed, murmur3 finalizer
        h = rows * jnp.uint32(n_features) + cols + seed * jnp.uint32(0x9E3779B9)
        h = h ^ (h >> jnp.uint32(16))
        h = h * jnp.uint32(0x85EBCA6B)
        h = h ^ (h >> jnp.uint32(13))
        h = h * jnp.uint32(0xC2B2AE35)
        h = h ^ (h >> jnp.uint32(16))
        threshold = jnp.uint32(min(int(p * 4294967296.0), 4294967295))
        keep = h >= threshold                                  # drop iff h < threshold
        y = jnp.where(keep, y * (1.0 / (1.0 - p)), jnp.zeros_like(y))
        # TODO(synk): dropout RNG stream is a hash PRNG, not torch's RNG stream.

    # ---- residual add ----
    o_ref[...] = (x + y).astype(o_ref.dtype)


def _choose_tm(n_rows, tm_max):
    """Largest sublane-aligned row tile <= tm_max that divides n_rows."""
    if n_rows <= tm_max:
        return n_rows
    t = tm_max - (tm_max % 8)
    while t >= 8:
        if n_rows % t == 0:
            return t
        t -= 8
    return n_rows


def sublayer_connection(x, a_2, b_2, w, bias, *, dropout_p, training, seed=0,
                        eps=1e-6, tm=256):
    """x: (B, S, D).  Returns x + dropout(Linear(LayerNorm(x)))."""
    b, s, d = x.shape
    n = b * s
    x2 = x.reshape(n, d)
    tm_eff = _choose_tm(n, tm)

    kernel = partial(_fused_sublayer_kernel, n_features=d, eps=float(eps),
                     p=float(dropout_p), training=bool(training), tm=tm_eff)

    out2 = pl.pallas_call(
        kernel,
        out_shape=jax.ShapeDtypeStruct((n, d), x.dtype),
        grid_spec=pltpu.PrefetchScalarGridSpec(
            num_scalar_prefetch=1,
            grid=(n // tm_eff,),
            in_specs=[
                pl.BlockSpec((tm_eff, d), lambda i, sd: (i, 0)),   # x rows (streamed)
                pl.BlockSpec((1, d), lambda i, sd: (0, 0)),        # gamma (resident)
                pl.BlockSpec((1, d), lambda i, sd: (0, 0)),        # beta  (resident)
                pl.BlockSpec((d, d), lambda i, sd: (0, 0)),        # W     (resident)
                pl.BlockSpec((1, d), lambda i, sd: (0, 0)),        # bias  (resident)
            ],
            out_specs=pl.BlockSpec((tm_eff, d), lambda i, sd: (i, 0)),
        ),
        compiler_params=pltpu.CompilerParams(
            # row axis is embarrassingly parallel -> megacore shard on v7x
            dimension_semantics=("parallel",),
        ),
    )(jnp.asarray([seed], dtype=jnp.int32), x2, a_2.reshape(1, d),
      b_2.reshape(1, d), w, bias.reshape(1, d))

    return out2.reshape(b, s, d)


# ----------------------------------------------------------------------------
# main
# ----------------------------------------------------------------------------
if __name__ == "__main__":
    B, S, D = 2, 8, 128          # D=128 keeps every vreg / store lane-dense
    dropout_p = 0.1

    key = jax.random.PRNGKey(0)
    kx, kw, kb = jax.random.split(key, 3)
    x = jax.random.normal(kx, (B, S, D), dtype=jnp.float32)

    # LayerNorm params exactly as in __init__: ones / zeros
    a_2 = jnp.ones((D,), dtype=jnp.float32)
    b_2 = jnp.zeros((D,), dtype=jnp.float32)

    # Deterministic demo sublayer: Linear(D, D)
    W = 0.05 * jax.random.normal(kw, (D, D), dtype=jnp.float32)
    bias = 0.05 * jax.random.normal(kb, (D,), dtype=jnp.float32)

    # --- eval mode (dropout = identity): check against a pure-JAX reference ---
    out_eval = sublayer_connection(x, a_2, b_2, W, bias,
                                   dropout_p=dropout_p, training=False, seed=0)
    jax.block_until_ready(out_eval)

    def ref_layernorm(v):
        mean = jnp.mean(v, axis=-1, keepdims=True)
        var = jnp.sum((v - mean) ** 2, axis=-1, keepdims=True) / (D - 1)
        std = jnp.sqrt(var)
        return a_2 * (v - mean) / (std + 1e-6) + b_2

    ref = x + (jnp.dot(ref_layernorm(x).reshape(B * S, D), W) + bias).reshape(B, S, D)
    assert jnp.allclose(out_eval, ref, atol=1e-5, rtol=1e-5), "mismatch vs reference"

    # --- training mode: exercise the in-kernel dropout path ---
    out_train = sublayer_connection(x, a_2, b_2, W, bias,
                                    dropout_p=dropout_p, training=True, seed=123)
    jax.block_until_ready(out_train)
    assert out_train.shape == x.shape
    assert bool(jnp.all(jnp.isfinite(out_train)))

    print("KERNEL_OK")
</pallas_src>

<mosaic_0001>
module attributes {stable_mosaic.version = 11 : i64} {
  func.func @_fused_sublayer_kernel(%arg0: i32, %arg1: memref<1xi32, #tpu.memory_space<smem>>, %arg2: memref<16x128xf32, #tpu.memory_space<vmem>>, %arg3: memref<1x128xf32, #tpu.memory_space<vmem>>, %arg4: memref<1x128xf32, #tpu.memory_space<vmem>>, %arg5: memref<128x128xf32, #tpu.memory_space<vmem>>, %arg6: memref<1x128xf32, #tpu.memory_space<vmem>>, %arg7: memref<16x128xf32, #tpu.memory_space<vmem>>) attributes {dimension_semantics = [#tpu.dimension_semantics<parallel>], iteration_bounds = array<i64: 1>, scalar_prefetch = 1 : i64, scratch_operands = 0 : i64, tpu.core_type = #tpu.core_type<tc>, window_params = [{transform_indices = @transform_0, window_bounds = array<i64: 16, 128>}, {pipeline_mode = #tpu.pipeline_mode<synchronous>, transform_indices = @transform_1, window_bounds = array<i64: 1, 128>}, {pipeline_mode = #tpu.pipeline_mode<synchronous>, transform_indices = @transform_2, window_bounds = array<i64: 1, 128>}, {pipeline_mode = #tpu.pipeline_mode<synchronous>, transform_indices = @transform_3, window_bounds = array<i64: 128, 128>}, {pipeline_mode = #tpu.pipeline_mode<synchronous>, transform_indices = @transform_4, window_bounds = array<i64: 1, 128>}, {transform_indices = @transform_5, window_bounds = array<i64: 16, 128>}]} {
    %c0 = arith.constant 0 : index
    %c0_0 = arith.constant 0 : index
    %0 = vector.load %arg2[%c0, %c0_0] : memref<16x128xf32, #tpu.memory_space<vmem>>, vector<16x128xf32>
    %cst = arith.constant dense<0.000000e+00> : vector<16xf32>
    %1 = vector.multi_reduction <add>, %0, %cst [1] : vector<16x128xf32> to vector<16xf32>
    %2 = vector.shape_cast %1 : vector<16xf32> to vector<16x1xf32>
    %cst_1 = arith.constant 1.280000e+02 : f32
    %3 = vector.broadcast %cst_1 : f32 to vector<16x1xf32>
    %4 = arith.divf %2, %3 : vector<16x1xf32>
    %5 = vector.broadcast %4 : vector<16x1xf32> to vector<16x128xf32>
    %6 = arith.subf %0, %5 : vector<16x128xf32>
    %7 = arith.mulf %6, %6 : vector<16x128xf32>
    %cst_2 = arith.constant dense<0.000000e+00> : vector<16xf32>
    %8 = vector.multi_reduction <add>, %7, %cst_2 [1] : vector<16x128xf32> to vector<16xf32>
    %9 = vector.shape_cast %8 : vector<16xf32> to vector<16x1xf32>
    %cst_3 = arith.constant 0.00787401571 : f32
    %10 = vector.broadcast %cst_3 : f32 to vector<16x1xf32>
    %11 = arith.mulf %9, %10 : vector<16x1xf32>
    %12 = math.sqrt %11 : vector<16x1xf32>
    %cst_4 = arith.constant 9.99999997E-7 : f32
    %13 = vector.broadcast %cst_4 : f32 to vector<16x1xf32>
    %14 = arith.addf %12, %13 : vector<16x1xf32>
    %cst_5 = arith.constant 1.000000e+00 : f32
    %15 = vector.broadcast %cst_5 : f32 to vector<16x1xf32>
    %16 = arith.divf %15, %14 : vector<16x1xf32>
    %c0_6 = arith.constant 0 : index
    %c0_7 = arith.constant 0 : index
    %17 = vector.load %arg3[%c0_6, %c0_7] : memref<1x128xf32, #tpu.memory_space<vmem>>, vector<1x128xf32>
    %18 = vector.broadcast %16 : vector<16x1xf32> to vector<16x128xf32>
    %19 = arith.mulf %6, %18 : vector<16x128xf32>
    %20 = vector.broadcast %17 : vector<1x128xf32> to vector<16x128xf32>
    %21 = arith.mulf %20, %19 : vector<16x128xf32>
    %c0_8 = arith.constant 0 : index
    %c0_9 = arith.constant 0 : index
    %22 = vector.load %arg4[%c0_8, %c0_9] : memref<1x128xf32, #tpu.memory_space<vmem>>, vector<1x128xf32>
    %23 = vector.broadcast %22 : vector<1x128xf32> to vector<16x128xf32>
    %24 = arith.addf %21, %23 : vector<16x128xf32>
    %c0_10 = arith.constant 0 : index
    %c0_11 = arith.constant 0 : index
    %25 = vector.load %arg5[%c0_10, %c0_11] : memref<128x128xf32, #tpu.memory_space<vmem>>, vector<128x128xf32>
    %cst_12 = arith.constant dense<0.000000e+00> : vector<16x128xf32>
    %26 = tpu.matmul %24, %25, %cst_12 {dimension_numbers = #tpu.dot_dimension_numbers<[1], [0], [0], [1], [0, 0, 1, 1], [], []>} : vector<16x128xf32>, vector<128x128xf32>, vector<16x128xf32> -> vector<16x128xf32>
    %c0_13 = arith.constant 0 : index
    %c0_14 = arith.constant 0 : index
    %27 = vector.load %arg6[%c0_13, %c0_14] : memref<1x128xf32, #tpu.memory_space<vmem>>, vector<1x128xf32>
    %28 = vector.broadcast %27 : vector<1x128xf32> to vector<16x128xf32>
    %29 = arith.addf %26, %28 : vector<16x128xf32>
    %30 = arith.addf %0, %29 : vector<16x128xf32>
    %c0_15 = arith.constant 0 : index
    %c0_16 = arith.constant 0 : index
    %31 = vector.load %arg7[%c0_15, %c0_16] : memref<16x128xf32, #tpu.memory_space<vmem>>, vector<16x128xf32>
    tpu.vector_store %arg7[%c0_15, %c0_16], %30 {strides = array<i32>} : memref<16x128xf32, #tpu.memory_space<vmem>>, vector<16x128xf32>,
    return
  }
  func.func @transform_0(%arg0: i32, %arg1: memref<1xi32, #tpu.memory_space<smem>>) -> (i32, i32) {
    %c0_i32 = arith.constant 0 : i32
    %c0_i32_0 = arith.constant 0 : i32
    return %arg0, %c0_i32 : i32, i32
  }
  func.func @transform_1(%arg0: i32, %arg1: memref<1xi32, #tpu.memory_space<smem>>) -> (i32, i32) {
    %c0_i32 = arith.constant 0 : i32
    %c0_i32_0 = arith.constant 0 : i32
    %c0_i32_1 = arith.constant 0 : i32
    return %c0_i32, %c0_i32_0 : i32, i32
  }
  func.func @transform_2(%arg0: i32, %arg1: memref<1xi32, #tpu.memory_space<smem>>) -> (i32, i32) {
    %c0_i32 = arith.constant 0 : i32
    %c0_i32_0 = arith.constant 0 : i32
    %c0_i32_1 = arith.constant 0 : i32
    return %c0_i32, %c0_i32_0 : i32, i32
  }
  func.func @transform_3(%arg0: i32, %arg1: memref<1xi32, #tpu.memory_space<smem>>) -> (i32, i32) {
    %c0_i32 = arith.constant 0 : i32
    %c0_i32_0 = arith.constant 0 : i32
    %c0_i32_1 = arith.constant 0 : i32
    return %c0_i32, %c0_i32_0 : i32, i32
  }
  func.func @transform_4(%arg0: i32, %arg1: memref<1xi32, #tpu.memory_space<smem>>) -> (i32, i32) {
    %c0_i32 = arith.constant 0 : i32
    %c0_i32_0 = arith.constant 0 : i32
    %c0_i32_1 = arith.constant 0 : i32
    return %c0_i32, %c0_i32_0 : i32, i32
  }
  func.func @transform_5(%arg0: i32, %arg1: memref<1xi32, #tpu.memory_space<smem>>) -> (i32, i32) {
    %c0_i32 = arith.constant 0 : i32
    %c0_i32_0 = arith.constant 0 : i32
    return %arg0, %c0_i32 : i32, i32
  }
}

</mosaic_0001>

<llo_original>
// kernel: tpu_custom_call.1
$region0: #{tpu_custom_call.1}
  #allocation0 [shape = 'u32[]', space=smem, size = 0x4, offset = 0x4, fixed_abs, tag = 'smem constant byte address 0x4 - core index']
  #allocation1 [shape = 'u32[144,128]{1,0:T(1,128)}', space=vmem, size = 0x12000, scoped, tag = 'internal scratch']
  #allocation2 [shape = 's32[1]{0}', space=sflag, size = 0x4, scoped, tag = 'scoped memory for tpu_custom_call.1']
  #allocation3 [shape = 's32[1]{0:T(128)S(6)}', space=smem, size = 0x200, scoped, tag = 'prefetched SMEM operand 0']
  %s0 = inlined_call_operand.<no memory space> [shape: s32[1], index: 0, kind: input, shape index: {}]
  %s1 = inlined_call_operand.hbm [shape: f32[16,128], index: 1, kind: input, shape index: {}]
  %s2 = inlined_call_operand.vmem [shape: f32[1,128], index: 2, kind: input, shape index: {}]
  %s3 = inlined_call_operand.vmem [shape: f32[1,128], index: 3, kind: input, shape index: {}]
  %s4 = inlined_call_operand.hbm [shape: f32[128,128], index: 4, kind: input, shape index: {}]
  %s5 = inlined_call_operand.vmem [shape: f32[1,128], index: 5, kind: input, shape index: {}]
  %s6 = inlined_call_operand.hbm [shape: f32[16,128], index: 6, kind: output, shape index: {}]
  %s7 = sld [smem:[#allocation0]]
  $region38: #{tpu_custom_call.1} parent=0
    _
  %s9 = ssub.s32 1, %s7
  %s10 = scalar_select 0, %s9, %s7
  %11 = sst [smem:[#allocation3]] %s0
  $region1: #{tpu_custom_call.1} parent=0
    #allocation4 [shape = 'u8[8192]{0}', space=vmem, size = 0x2000, scoped, tag = 'input window, operand 1, single buffered']
    #allocation5 [shape = 's32[1]{0}', space=sflag, size = 0x4, scoped, tag = 'scoped memory for tpu_custom_call.1']
    #allocation6 [shape = 's32[1]{0}', space=sflag, size = 0x4, scoped, tag = 'scoped memory for tpu_custom_call.1']
    #allocation7 [shape = 'u8[65536]{0}', space=vmem, size = 0x10000, scoped, tag = 'input window, operand 4, single buffered']
    #allocation8 [shape = 's32[1]{0}', space=sflag, size = 0x4, scoped, tag = 'scoped memory for tpu_custom_call.1']
    #allocation9 [shape = 'u8[8192]{0}', space=vmem, size = 0x2000, scoped, tag = 'output window, operand 0, single buffered']
    %12 = vsyncpa [#allocation5], 0
    %13 = vsyncpa [#allocation8], 0
    %14 = vsyncpa [#allocation6], 0
    // Predicated region
    $region2: #{tpu_custom_call.1} parent=1 // pred_check
      _
    $region3: #{tpu_custom_call.1} parent=1 // pred_check_branch
      %16 = sbr.rel (0) target = $region5
    $region4: #{tpu_custom_call.1} parent=1 // pred_region
      %s18 = ssub.s32 256, 256
      %19 = vsyncadd [#allocation5], %s18
      %s20 = sshll.u32 [#allocation4], 4
      %s21 = int_to_ptr.vmem [resolvable:$true] %s20
      %26 = dma.hbm_to_vmem [thread:$0]  %s1, 256, %s21, [#allocation5], 128, 128, 8
    $region5: #{tpu_custom_call.1} parent=1 // pred_fallthru
      _
    // Predicated region
    $region6: #{tpu_custom_call.1} parent=1 // pred_check
      _
    $region7: #{tpu_custom_call.1} parent=1 // pred_check_branch
      %28 = sbr.rel (0) target = $region9
    $region8: #{tpu_custom_call.1} parent=1 // pred_region
      _
    $region9: #{tpu_custom_call.1} parent=1 // pred_fallthru
      _
    // Predicated region
    $region10: #{tpu_custom_call.1} parent=1 // pred_check
      _
    $region11: #{tpu_custom_call.1} parent=1 // pred_check_branch
      %30 = sbr.rel (0) target = $region13
    $region12: #{tpu_custom_call.1} parent=1 // pred_region
      _
    $region13: #{tpu_custom_call.1} parent=1 // pred_fallthru
      _
    // Predicated region
    $region14: #{tpu_custom_call.1} parent=1 // pred_check
      _
    $region15: #{tpu_custom_call.1} parent=1 // pred_check_branch
      %32 = sbr.rel (0) target = $region17
    $region16: #{tpu_custom_call.1} parent=1 // pred_region
      %s34 = ssub.s32 2048, 2048
      %35 = vsyncadd [#allocation8], %s34
      %s36 = sshll.u32 [#allocation7], 4
      %s37 = int_to_ptr.vmem [resolvable:$true] %s36
      %42 = dma.hbm_to_vmem [thread:$0]  %s4, 2048, %s37, [#allocation8], 128, 128, 8
    $region17: #{tpu_custom_call.1} parent=1 // pred_fallthru
      _
    // Predicated region
    $region18: #{tpu_custom_call.1} parent=1 // pred_check
      _
    $region19: #{tpu_custom_call.1} parent=1 // pred_check_branch
      %44 = sbr.rel (0) target = $region21
    $region20: #{tpu_custom_call.1} parent=1 // pred_region
      _
    $region21: #{tpu_custom_call.1} parent=1 // pred_fallthru
      _
    // Predicated region
    $region22: #{tpu_custom_call.1} parent=1 // pred_check
      _
    $region23: #{tpu_custom_call.1} parent=1 // pred_check_branch
      %46 = sbr.rel (0) target = $region25
    $region24: #{tpu_custom_call.1} parent=1 // pred_region
      %47 = dma.done [#allocation5], 256
    $region25: #{tpu_custom_call.1} parent=1 // pred_fallthru
      _
    // Predicated region
    $region26: #{tpu_custom_call.1} parent=1 // pred_check
      _
    $region27: #{tpu_custom_call.1} parent=1 // pred_check_branch
      %49 = sbr.rel (0) target = $region29
    $region28: #{tpu_custom_call.1} parent=1 // pred_region
      %50 = dma.done [#allocation8], 2048
    $region29: #{tpu_custom_call.1} parent=1 // pred_fallthru
      _
    %v51 = vld [vmem:[#allocation4] sm:$0xff]
    %v52 = vld [vmem:[#allocation4 + $0x8] sm:$0xff]
    %53 = vadd.xlane.f32.xlu0 %v51
    %v54 = vpop.xlane.xlu0 %53
    %55 = vadd.xlane.f32.xlu0 %v52
    %v56 = vpop.xlane.xlu0 %55
    %v57 = vrcp.pop 128.0
    %v58 = vmul.f32 %v54, %v57
    %v59 = vmul.f32 %v56, %v57
    %v60 = vsub.f32 %v51, %v58
    %v61 = vsub.f32 %v52, %v59
    %v62 = vmul.f32 %v60, %v60
    %v63 = vmul.f32 %v61, %v61
    %64 = vadd.xlane.f32.xlu0 %v62
    %v65 = vpop.xlane.xlu0 %64
    %66 = vadd.xlane.f32.xlu0 %v63
    %v67 = vpop.xlane.xlu0 %66
    %v68 = vmul.f32 %v65, 0.007874016
    %v69 = vmul.f32 %v67, 0.007874016
    %v70 = vrsqrt.pop %v68
    %v71 = vmul.f32 %v68, %v70
    %vm72 = vcmp.eq.f32.partialorder %v68, inf
    %v73 = vsel %vm72, %v68, %v71
    %vm74 = vcmp.eq.f32.partialorder %v68, 0.0
    %v75 = vand.u32 %v68, 2147483648
    %v76 = vsel %vm74, %v75, %v73
    %v77 = vrsqrt.pop %v69
    %v78 = vmul.f32 %v69, %v77
    %vm79 = vcmp.eq.f32.partialorder %v69, inf
    %v80 = vsel %vm79, %v69, %v78
    %vm81 = vcmp.eq.f32.partialorder %v69, 0.0
    %v82 = vand.u32 %v69, 2147483648
    %v83 = vsel %vm81, %v82, %v80
    %v84 = vadd.f32 %v76, 1e-06
    %v85 = vadd.f32 %v83, 1e-06
    %v86 = vrcp.pop %v84
    %v87 = vmul.f32 1.0, %v86
    %v88 = vrcp.pop %v85
    %v89 = vmul.f32 1.0, %v88
    %v90 = vld [vmem:[%s2] sm:$0x1]
    %v91 = vmul.f32 %v60, %v87
    %v92 = vmul.f32 %v61, %v89
    %v94 = vlaneseq
    %v95 = vshrl.u32 %v94, 7
    %v96 = vsub.s32 0, %v95
    %v97 = vrot.slane %v90, %v96
    %v99 = vmul.f32 %v97, %v91
    %v100 = vmul.f32 %v97, %v92
    %v101 = vld [vmem:[%s3] sm:$0x1]
    %v103 = vlaneseq
    %v104 = vshrl.u32 %v103, 7
    %v105 = vsub.s32 0, %v104
    %v106 = vrot.slane %v101, %v105
    %v108 = vadd.f32 %v99, %v106
    %v109 = vadd.f32 %v100, %v106
    %v110 = vld [vmem:[#allocation7] sm:$0xff]
    %v111 = vld [vmem:[#allocation7 + $0x8] sm:$0xff]
    %v112 = vld [vmem:[#allocation7 + $0x10] sm:$0xff]
    %v113 = vld [vmem:[#allocation7 + $0x18] sm:$0xff]
    %v114 = vld [vmem:[#allocation7 + $0x20] sm:$0xff]
    %v115 = vld [vmem:[#allocation7 + $0x28] sm:$0xff]
    %v116 = vld [vmem:[#allocation7 + $0x30] sm:$0xff]
    %v117 = vld [vmem:[#allocation7 + $0x38] sm:$0xff]
    %v118 = vld [vmem:[#allocation7 + $0x40] sm:$0xff]
    %v119 = vld [vmem:[#allocation7 + $0x48] sm:$0xff]
    %v120 = vld [vmem:[#allocation7 + $0x50] sm:$0xff]
    %v121 = vld [vmem:[#allocation7 + $0x58] sm:$0xff]
    %v122 = vld [vmem:[#allocation7 + $0x60] sm:$0xff]
    %v123 = vld [vmem:[#allocation7 + $0x68] sm:$0xff]
    %v124 = vld [vmem:[#allocation7 + $0x70] sm:$0xff]
    %v125 = vld [vmem:[#allocation7 + $0x78] sm:$0xff]
    %v126 = vld [vmem:[%s5] sm:$0x1]
    %v128 = vlaneseq
    %v129 = vshrl.u32 %v128, 7
    %v130 = vsub.s32 0, %v129
    %v131 = vrot.slane %v126, %v130
    %133 = vmatprep.subr.mxu0 0.0
    %134 = vmatpush1.msra.mxu0 %v125
    %135 = vmatprep.subr.mxu0 0.0
    %136 = vmatpush1.msra.mxu0 %v124
    %137 = vmatprep.subr.mxu0 0.0
    %138 = vmatpush1.msra.mxu0 %v123
    %139 = vmatprep.subr.mxu0 0.0
    %140 = vmatpush1.msra.mxu0 %v122
    %141 = vmatprep.subr.mxu0 0.0
    %142 = vmatpush1.msra.mxu0 %v121
    %143 = vmatprep.subr.mxu0 0.0
    %144 = vmatpush1.msra.mxu0 %v120
    %145 = vmatprep.subr.mxu0 0.0
    %146 = vmatpush1.msra.mxu0 %v119
    %147 = vmatprep.subr.mxu0 0.0
    %148 = vmatpush1.msra.mxu0 %v118
    %149 = vmatprep.subr.mxu0 0.0
    %150 = vmatpush1.msra.mxu0 %v117
    %151 = vmatprep.subr.mxu0 0.0
    %152 = vmatpush1.msra.mxu0 %v116
    %153 = vmatprep.subr.mxu0 0.0
    %154 = vmatpush1.msra.mxu0 %v115
    %155 = vmatprep.subr.mxu0 0.0
    %156 = vmatpush1.msra.mxu0 %v114
    %157 = vmatprep.subr.mxu0 0.0
    %158 = vmatpush1.msra.mxu0 %v113
    %159 = vmatprep.subr.mxu0 0.0
    %160 = vmatpush1.msra.mxu0 %v112
    %161 = vmatprep.subr.mxu0 0.0
    %162 = vmatpush1.msra.mxu0 %v111
    %163 = vmatprep.subr.mxu0 0.0
    %164 = vmatpush1.msra.mxu0 %v110
    %165 = vmatprep.subr.mxu0 0.0
    %166 = vmatpush2.msra.mxu0 0.0
    %167 = vmatprep.subr.mxu0 0.0
    %168 = vmatpush2.msra.mxu0 0.0
    %169 = vmatprep.subr.mxu0 0.0
    %170 = vmatpush2.msra.mxu0 0.0
    %171 = vmatprep.subr.mxu0 0.0
    %172 = vmatpush2.msra.mxu0 0.0
    %173 = vmatprep.subr.mxu0 0.0
    %174 = vmatpush2.msra.mxu0 0.0
    %175 = vmatprep.subr.mxu0 0.0
    %176 = vmatpush2.msra.mxu0 0.0
    %177 = vmatprep.subr.mxu0 0.0
    %178 = vmatpush2.msra.mxu0 0.0
    %179 = vmatprep.subr.mxu0 0.0
    %180 = vmatpush2.msra.mxu0 0.0
    %181 = vmatprep.subr.mxu0 0.0
    %182 = vmatpush2.msra.mxu0 0.0
    %183 = vmatprep.subr.mxu0 0.0
    %184 = vmatpush2.msra.mxu0 0.0
    %185 = vmatprep.subr.mxu0 0.0
    %186 = vmatpush2.msra.mxu0 0.0
    %187 = vmatprep.subr.mxu0 0.0
    %188 = vmatpush2.msra.mxu0 0.0
    %189 = vmatprep.subr.mxu0 0.0
    %190 = vmatpush2.msra.mxu0 0.0
    %191 = vmatprep.subr.mxu0 0.0
    %192 = vmatpush2.msra.mxu0 0.0
    %193 = vmatprep.subr.mxu0 0.0
    %194 = vmatpush2.msra.mxu0 0.0
    %195 = vmatprep.subr.mxu0 0.0
    %196 = vmatpush2.msra.mxu0 0.0
    %197 = vmatprep.mubr.f32.mxu0 0.0
    %198 = vmatmul.mubr.f32.gmra.mxu0 %v108
    %v199 = vpop.f32.mrf.mxu0
    %v200 = vadd.f32 %v131, %v199
    %v201 = vpop.f32.mrf.mxu0
    %202 = vmatprep.mubr.f32.mxu0 0.0
    %203 = vmatmul.mubr.f32.gmra.mxu0 %v109
    %v204 = vpop.f32.mrf.mxu0
    %v205 = vadd.f32 %v131, %v204
    %v206 = vpop.f32.mrf.mxu0
    %207 = vdwg.mxu0
    %v208 = vadd.f32 %v51, %v200
    %v209 = vadd.f32 %v52, %v205
    %210 = vst [vmem:[#allocation9] sm:$0xff] %v208
    %211 = vst [vmem:[#allocation9 + $0x8] sm:$0xff] %v209
    // Predicated region
    $region30: #{tpu_custom_call.1} parent=1 // pred_check
      _
    $region31: #{tpu_custom_call.1} parent=1 // pred_check_branch
      %213 = sbr.rel (0) target = $region33
    $region32: #{tpu_custom_call.1} parent=1 // pred_region
      %s215 = ssub.s32 256, 256
      %216 = vsyncadd [#allocation6], %s215
      %s217 = sshll.u32 [#allocation9], 4
      %s218 = int_to_ptr.vmem [resolvable:$true] %s217
      %223 = dma.vmem_to_hbm [thread:$0]  %s218, 256, %s6, [#allocation6], 128, 128, 8
    $region33: #{tpu_custom_call.1} parent=1 // pred_fallthru
      _
    // Predicated region
    $region34: #{tpu_custom_call.1} parent=1 // pred_check
      _
    $region35: #{tpu_custom_call.1} parent=1 // pred_check_branch
      %225 = sbr.rel (0) target = $region37
    $region36: #{tpu_custom_call.1} parent=1 // pred_region
      %226 = dma.done [#allocation6], 256
    $region37: #{tpu_custom_call.1} parent=1 // pred_fallthru
      _
    %227 = vsyncpa [#allocation5], 1
    %228 = vsyncpa [#allocation8], 1
    %229 = vsyncpa [#allocation6], 1

</llo_original>
